<compile_context>
chip_gen: v6e
topology: v6e:2x2x1
jax: 0.10.0
libtpu: 0.0.40
codegen_flags: <defaults>
</compile_context>

<pallas_src>
import functools

import jax
import jax.numpy as jnp
from jax import lax
from jax.experimental import pallas as pl
from jax.experimental.pallas import tpu as pltpu


def _round_up(x, m):
    return (x + m - 1) // m * m


def _rnn_qnet_kernel(x_ref, w0_ref, b0_ref, wih_ref, brnn_ref, wf_ref, bf_ref,
                     ot_ref):
    """Fused 3-stage MLP in transposed (M-on-lanes) layout.

      h1^T = relu(W0 @ x^T + b0)                (H, bm)
      h2^T = relu(Wih @ h1^T + b_ih + b_hh)     (H, bm)   zero-state RNN step
      y^T  = Wf @ h2^T + bf                     (A, bm)   lane-dense store

    Matmul operands are bf16; accumulation and bias/relu epilogues are f32.
    """
    x = x_ref[...].astype(jnp.bfloat16)                      # (bm, In), in-kernel cast
    # NT matmul: contract the feature (In) dims -> (H, bm); M sits on lanes.
    h1t = lax.dot_general(w0_ref[...], x, (((1,), (1,)), ((), ())),
                          preferred_element_type=jnp.float32)
    h1t = jnp.maximum(h1t + b0_ref[...], 0.0)                # (H, bm) f32
    h2t = jnp.dot(wih_ref[...], h1t.astype(jnp.bfloat16),
                  preferred_element_type=jnp.float32)
    h2t = jnp.maximum(h2t + brnn_ref[...], 0.0)              # (H, bm)
    yt = jnp.dot(wf_ref[...], h2t.astype(jnp.bfloat16),
                 preferred_element_type=jnp.float32)
    ot_ref[...] = yt + bf_ref[...]                           # (A, bm) f32


def prepare_params(params):
    """One-time param prep: keep weights in (out, in) orientation, combine the
    two RNN biases, cast matmul operands to bf16, reshape biases to (out, 1)
    so they lane-broadcast against the transposed activations."""
    H = params["w_initial"].shape[0]
    A = params["w_final"].shape[0]
    return {
        "w0":   params["w_initial"].astype(jnp.bfloat16),             # (H, In)
        "b0":   params["b_initial"].reshape(H, 1).astype(jnp.float32),
        "wih":  params["w_ih"].astype(jnp.bfloat16),                  # (H, H)
        "brnn": (params["b_ih"] + params["b_hh"]).reshape(H, 1).astype(jnp.float32),
        "wf":   params["w_final"].astype(jnp.bfloat16),               # (A, H)
        "bf":   params["b_final"].reshape(A, 1).astype(jnp.float32),
    }


@functools.partial(jax.jit, static_argnames=("block_m",))
def _forward_flat(x_flat, w0, b0, wih, brnn, wf, bf, *, block_m):
    """x_flat: (M, In) native dtype. Returns y^T: (A, M) f32."""
    M, In = x_flat.shape
    H = w0.shape[0]
    A = wf.shape[0]

    grid = (pl.cdiv(M, block_m),)   # ragged tail handled by Pallas block masking
    out_t = pl.pallas_call(
        _rnn_qnet_kernel,
        out_shape=jax.ShapeDtypeStruct((A, M), jnp.float32),
        grid=grid,
        in_specs=[
            pl.BlockSpec((block_m, In), lambda i: (i, 0)),   # x tile (pipelined)
            pl.BlockSpec((H, In), lambda i: (0, 0)),         # weights: resident
            pl.BlockSpec((H, 1), lambda i: (0, 0)),
            pl.BlockSpec((H, H), lambda i: (0, 0)),
            pl.BlockSpec((H, 1), lambda i: (0, 0)),
            pl.BlockSpec((A, H), lambda i: (0, 0)),
            pl.BlockSpec((A, 1), lambda i: (0, 0)),
        ],
        out_specs=pl.BlockSpec((A, block_m), lambda i: (0, i)),   # lane-dense
        compiler_params=pltpu.CompilerParams(
            dimension_semantics=("parallel",)),
    )(x_flat, w0, b0, wih, brnn, wf, bf)
    return out_t


def rnn_qnetwork_zero_state_forward(x, prepared, block_m=None):
    """x: (B, T, input_size) or (T, input_size). Returns (B, T, action_size)."""
    if x.ndim < 3:
        x = x[None, ...]
    B, T, In = x.shape
    M = B * T
    A = prepared["wf"].shape[0]

    if block_m is None:
        block_m = 4096  # sweep 2048-8192; buffers stay far below VMEM limits
    # Lane-dense output tiles: block_m a multiple of 128 (>= bf16 16-row pack).
    block_m = max(128, _round_up(min(block_m, M), 128))
    # v7x megacore: keep >= 2 parallel grid steps when there is enough work.
    if M > 128:
        block_m = min(block_m, _round_up(pl.cdiv(M, 2), 128))

    x_flat = x.reshape(M, In)   # no astype / pad: cast in-kernel, ragged tail masked
    out_t = _forward_flat(x_flat, prepared["w0"], prepared["b0"],
                          prepared["wih"], prepared["brnn"],
                          prepared["wf"], prepared["bf"], block_m=block_m)
    # (A, M) -> (B, T, A): tiny layout-plumbing transpose outside the kernel.
    return out_t.T.reshape(B, T, A)


def init_params(key, input_size, hidden_size, action_size):
    """Deterministic synthetic parameters (PyTorch-style uniform fan-in init)."""
    ks = jax.random.split(key, 8)

    def u(k, shape, fan_in):
        bound = 1.0 / jnp.sqrt(fan_in)
        return jax.random.uniform(k, shape, jnp.float32, -bound, bound)

    return {
        "w_initial": u(ks[0], (hidden_size, input_size), input_size),
        "b_initial": u(ks[1], (hidden_size,), input_size),
        "w_ih":      u(ks[2], (hidden_size, hidden_size), hidden_size),
        "b_ih":      u(ks[3], (hidden_size,), hidden_size),
        # w_hh exists in the module but multiplies a zero hidden state every
        # step, so only its bias b_hh affects the output.
        "b_hh":      u(ks[4], (hidden_size,), hidden_size),
        "w_final":   u(ks[5], (action_size, hidden_size), hidden_size),
        "b_final":   u(ks[6], (action_size,), hidden_size),
    }


def _reference(x, p):
    """Pure-JAX f32 reference of the PyTorch forward (zero hidden state per step)."""
    if x.ndim < 3:
        x = x[None, ...]
    h1 = jax.nn.relu(x @ p["w_initial"].T + p["b_initial"])
    h2 = jax.nn.relu(h1 @ p["w_ih"].T + p["b_ih"] + p["b_hh"])
    return h2 @ p["w_final"].T + p["b_final"]


if __name__ == "__main__":
    input_size = 16
    hidden_state_size = 32
    action_size = 4

    key = jax.random.PRNGKey(0)
    k_x, k_x2, k_p = jax.random.split(key, 3)
    params = init_params(k_p, input_size, hidden_state_size, action_size)
    prepared = prepare_params(params)

    # Case 1: M = B*T divides nothing special -> single ragged block.
    B, T = 2, 8
    x = jax.random.normal(k_x, (B, T, input_size), jnp.float32)
    y = jax.block_until_ready(rnn_qnetwork_zero_state_forward(x, prepared))
    y_ref = _reference(x, params)
    assert y.shape == (B, T, action_size)
    # bf16 matmul operands (f32 accumulation) -> loosened tolerance vs f32 ref.
    assert jnp.allclose(y, y_ref, atol=5e-2, rtol=5e-2), \
        f"max abs err {jnp.max(jnp.abs(y - y_ref))}"

    # Case 2: M = 15 (exercises the ragged-final-block masking path).
    B2, T2 = 3, 5
    x2 = jax.random.normal(k_x2, (B2, T2, input_size), jnp.float32)
    y2 = jax.block_until_ready(rnn_qnetwork_zero_state_forward(x2, prepared))
    y2_ref = _reference(x2, params)
    assert y2.shape == (B2, T2, action_size)
    assert jnp.allclose(y2, y2_ref, atol=5e-2, rtol=5e-2), \
        f"max abs err {jnp.max(jnp.abs(y2 - y2_ref))}"

    print("KERNEL_OK")
</pallas_src>

<mosaic_0001>
module attributes {stable_mosaic.version = 11 : i64} {
  func.func @_rnn_qnet_kernel(%arg0: i32, %arg1: memref<128x16xf32, #tpu.memory_space<vmem>>, %arg2: memref<32x16xbf16, #tpu.memory_space<vmem>>, %arg3: memref<32x1xf32, #tpu.memory_space<vmem>>, %arg4: memref<32x32xbf16, #tpu.memory_space<vmem>>, %arg5: memref<32x1xf32, #tpu.memory_space<vmem>>, %arg6: memref<4x32xbf16, #tpu.memory_space<vmem>>, %arg7: memref<4x1xf32, #tpu.memory_space<vmem>>, %arg8: memref<4x128xf32, #tpu.memory_space<vmem>>) attributes {dimension_semantics = [#tpu.dimension_semantics<parallel>], iteration_bounds = array<i64: 1>, scalar_prefetch = 0 : i64, scratch_operands = 0 : i64, tpu.core_type = #tpu.core_type<tc>, window_params = [{transform_indices = @transform_0, window_bounds = array<i64: 128, 16>}, {pipeline_mode = #tpu.pipeline_mode<synchronous>, transform_indices = @transform_1, window_bounds = array<i64: 32, 16>}, {pipeline_mode = #tpu.pipeline_mode<synchronous>, transform_indices = @transform_2, window_bounds = array<i64: 32, 1>}, {pipeline_mode = #tpu.pipeline_mode<synchronous>, transform_indices = @transform_3, window_bounds = array<i64: 32, 32>}, {pipeline_mode = #tpu.pipeline_mode<synchronous>, transform_indices = @transform_4, window_bounds = array<i64: 32, 1>}, {pipeline_mode = #tpu.pipeline_mode<synchronous>, transform_indices = @transform_5, window_bounds = array<i64: 4, 32>}, {pipeline_mode = #tpu.pipeline_mode<synchronous>, transform_indices = @transform_6, window_bounds = array<i64: 4, 1>}, {transform_indices = @transform_7, window_bounds = array<i64: 4, 128>}]} {
    %c0 = arith.constant 0 : index
    %c0_0 = arith.constant 0 : index
    %0 = vector.load %arg1[%c0, %c0_0] : memref<128x16xf32, #tpu.memory_space<vmem>>, vector<128x16xf32>
    %1 = arith.truncf %0 : vector<128x16xf32> to vector<128x16xbf16>
    %c0_1 = arith.constant 0 : index
    %c0_2 = arith.constant 0 : index
    %2 = vector.load %arg2[%c0_1, %c0_2] : memref<32x16xbf16, #tpu.memory_space<vmem>>, vector<32x16xbf16>
    %cst = arith.constant dense<0.000000e+00> : vector<32x128xf32>
    %3 = tpu.matmul %2, %1, %cst {dimension_numbers = #tpu.dot_dimension_numbers<[1], [1], [0], [0], [0, 0, 1, 0], [], []>} : vector<32x16xbf16>, vector<128x16xbf16>, vector<32x128xf32> -> vector<32x128xf32>
    %c0_3 = arith.constant 0 : index
    %c0_4 = arith.constant 0 : index
    %4 = vector.load %arg3[%c0_3, %c0_4] : memref<32x1xf32, #tpu.memory_space<vmem>>, vector<32x1xf32>
    %5 = vector.broadcast %4 : vector<32x1xf32> to vector<32x128xf32>
    %6 = arith.addf %3, %5 : vector<32x128xf32>
    %cst_5 = arith.constant 0.000000e+00 : f32
    %7 = vector.broadcast %cst_5 : f32 to vector<32x128xf32>
    %8 = arith.maximumf %6, %7 : vector<32x128xf32>
    %c0_6 = arith.constant 0 : index
    %c0_7 = arith.constant 0 : index
    %9 = vector.load %arg4[%c0_6, %c0_7] : memref<32x32xbf16, #tpu.memory_space<vmem>>, vector<32x32xbf16>
    %10 = arith.truncf %8 : vector<32x128xf32> to vector<32x128xbf16>
    %cst_8 = arith.constant dense<0.000000e+00> : vector<32x128xf32>
    %11 = tpu.matmul %9, %10, %cst_8 {dimension_numbers = #tpu.dot_dimension_numbers<[1], [0], [0], [1], [0, 0, 1, 1], [], []>} : vector<32x32xbf16>, vector<32x128xbf16>, vector<32x128xf32> -> vector<32x128xf32>
    %c0_9 = arith.constant 0 : index
    %c0_10 = arith.constant 0 : index
    %12 = vector.load %arg5[%c0_9, %c0_10] : memref<32x1xf32, #tpu.memory_space<vmem>>, vector<32x1xf32>
    %13 = vector.broadcast %12 : vector<32x1xf32> to vector<32x128xf32>
    %14 = arith.addf %11, %13 : vector<32x128xf32>
    %cst_11 = arith.constant 0.000000e+00 : f32
    %15 = vector.broadcast %cst_11 : f32 to vector<32x128xf32>
    %16 = arith.maximumf %14, %15 : vector<32x128xf32>
    %c0_12 = arith.constant 0 : index
    %c0_13 = arith.constant 0 : index
    %17 = vector.load %arg6[%c0_12, %c0_13] : memref<4x32xbf16, #tpu.memory_space<vmem>>, vector<4x32xbf16>
    %18 = arith.truncf %16 : vector<32x128xf32> to vector<32x128xbf16>
    %cst_14 = arith.constant dense<0.000000e+00> : vector<4x128xf32>
    %19 = tpu.matmul %17, %18, %cst_14 {dimension_numbers = #tpu.dot_dimension_numbers<[1], [0], [0], [1], [0, 0, 1, 1], [], []>} : vector<4x32xbf16>, vector<32x128xbf16>, vector<4x128xf32> -> vector<4x128xf32>
    %c0_15 = arith.constant 0 : index
    %c0_16 = arith.constant 0 : index
    %20 = vector.load %arg7[%c0_15, %c0_16] : memref<4x1xf32, #tpu.memory_space<vmem>>, vector<4x1xf32>
    %21 = vector.broadcast %20 : vector<4x1xf32> to vector<4x128xf32>
    %22 = arith.addf %19, %21 : vector<4x128xf32>
    %c0_17 = arith.constant 0 : index
    %c0_18 = arith.constant 0 : index
    %23 = vector.load %arg8[%c0_17, %c0_18] : memref<4x128xf32, #tpu.memory_space<vmem>>, vector<4x128xf32>
    tpu.vector_store %arg8[%c0_17, %c0_18], %22 {strides = array<i32>} : memref<4x128xf32, #tpu.memory_space<vmem>>, vector<4x128xf32>,
    return
  }
  func.func @transform_0(%arg0: i32) -> (i32, i32) {
    %c0_i32 = arith.constant 0 : i32
    %c0_i32_0 = arith.constant 0 : i32
    return %arg0, %c0_i32 : i32, i32
  }
  func.func @transform_1(%arg0: i32) -> (i32, i32) {
    %c0_i32 = arith.constant 0 : i32
    %c0_i32_0 = arith.constant 0 : i32
    %c0_i32_1 = arith.constant 0 : i32
    return %c0_i32, %c0_i32_0 : i32, i32
  }
  func.func @transform_2(%arg0: i32) -> (i32, i32) {
    %c0_i32 = arith.constant 0 : i32
    %c0_i32_0 = arith.constant 0 : i32
    %c0_i32_1 = arith.constant 0 : i32
    return %c0_i32, %c0_i32_0 : i32, i32
  }
  func.func @transform_3(%arg0: i32) -> (i32, i32) {
    %c0_i32 = arith.constant 0 : i32
    %c0_i32_0 = arith.constant 0 : i32
    %c0_i32_1 = arith.constant 0 : i32
    return %c0_i32, %c0_i32_0 : i32, i32
  }
  func.func @transform_4(%arg0: i32) -> (i32, i32) {
    %c0_i32 = arith.constant 0 : i32
    %c0_i32_0 = arith.constant 0 : i32
    %c0_i32_1 = arith.constant 0 : i32
    return %c0_i32, %c0_i32_0 : i32, i32
  }
  func.func @transform_5(%arg0: i32) -> (i32, i32) {
    %c0_i32 = arith.constant 0 : i32
    %c0_i32_0 = arith.constant 0 : i32
    %c0_i32_1 = arith.constant 0 : i32
    return %c0_i32, %c0_i32_0 : i32, i32
  }
  func.func @transform_6(%arg0: i32) -> (i32, i32) {
    %c0_i32 = arith.constant 0 : i32
    %c0_i32_0 = arith.constant 0 : i32
    %c0_i32_1 = arith.constant 0 : i32
    return %c0_i32, %c0_i32_0 : i32, i32
  }
  func.func @transform_7(%arg0: i32) -> (i32, i32) {
    %c0_i32 = arith.constant 0 : i32
    %c0_i32_0 = arith.constant 0 : i32
    return %c0_i32, %arg0 : i32, i32
  }
}

</mosaic_0001>

<llo_original>
// kernel: _forward_flat.1
$region0: #{_forward_flat.1}
  #allocation0 [shape = 'u32[]', space=smem, size = 0x4, offset = 0x4, fixed_abs, tag = 'smem constant byte address 0x4 - core index']
  #allocation1 [shape = 'u32[144,128]{1,0:T(1,128)}', space=vmem, size = 0x12000, scoped, tag = 'internal scratch']
  %s0 = inlined_call_operand.vmem [shape: f32[16,16], index: 0, kind: input, shape index: {}]
  %s1 = inlined_call_operand.vmem [shape: bf16[32,16], index: 1, kind: input, shape index: {}]
  %s2 = inlined_call_operand.vmem [shape: f32[32,1], index: 2, kind: input, shape index: {}]
  %s3 = inlined_call_operand.vmem [shape: bf16[32,32], index: 3, kind: input, shape index: {}]
  %s4 = inlined_call_operand.vmem [shape: f32[32,1], index: 4, kind: input, shape index: {}]
  %s5 = inlined_call_operand.vmem [shape: bf16[4,32], index: 5, kind: input, shape index: {}]
  %s6 = inlined_call_operand.vmem [shape: f32[4,1], index: 6, kind: input, shape index: {}]
  %s7 = inlined_call_operand.hbm [shape: f32[4,16], index: 7, kind: output, shape index: {}]
  %s8 = sld [smem:[#allocation0]]
  $region38: #{_forward_flat.1} parent=0
    _
  %s10 = ssub.s32 1, %s8
  %s11 = scalar_select 0, %s10, %s8
  $region1: #{_forward_flat.1} parent=0
    #allocation2 [shape = 'u8[2048]{0}', space=vmem, size = 0x800, scoped, tag = 'output window, operand 0, single buffered']
    #allocation3 [shape = 's32[1]{0}', space=sflag, size = 0x4, scoped, tag = 'scoped memory for _forward_flat.1']
    %12 = vsyncpa [#allocation3], 0
    // Predicated region
    $region2: #{_forward_flat.1} parent=1 // pred_check
      _
    $region3: #{_forward_flat.1} parent=1 // pred_check_branch
      %14 = sbr.rel (0) target = $region5
    $region4: #{_forward_flat.1} parent=1 // pred_region
      _
    $region5: #{_forward_flat.1} parent=1 // pred_fallthru
      _
    // Predicated region
    $region6: #{_forward_flat.1} parent=1 // pred_check
      _
    $region7: #{_forward_flat.1} parent=1 // pred_check_branch
      %16 = sbr.rel (0) target = $region9
    $region8: #{_forward_flat.1} parent=1 // pred_region
      _
    $region9: #{_forward_flat.1} parent=1 // pred_fallthru
      _
    // Predicated region
    $region10: #{_forward_flat.1} parent=1 // pred_check
      _
    $region11: #{_forward_flat.1} parent=1 // pred_check_branch
      %18 = sbr.rel (0) target = $region13
    $region12: #{_forward_flat.1} parent=1 // pred_region
      _
    $region13: #{_forward_flat.1} parent=1 // pred_fallthru
      _
    // Predicated region
    $region14: #{_forward_flat.1} parent=1 // pred_check
      _
    $region15: #{_forward_flat.1} parent=1 // pred_check_branch
      %20 = sbr.rel (0) target = $region17
    $region16: #{_forward_flat.1} parent=1 // pred_region
      _
    $region17: #{_forward_flat.1} parent=1 // pred_fallthru
      _
    // Predicated region
    $region18: #{_forward_flat.1} parent=1 // pred_check
      _
    $region19: #{_forward_flat.1} parent=1 // pred_check_branch
      %22 = sbr.rel (0) target = $region21
    $region20: #{_forward_flat.1} parent=1 // pred_region
      _
    $region21: #{_forward_flat.1} parent=1 // pred_fallthru
      _
    // Predicated region
    $region22: #{_forward_flat.1} parent=1 // pred_check
      _
    $region23: #{_forward_flat.1} parent=1 // pred_check_branch
      %24 = sbr.rel (0) target = $region25
    $region24: #{_forward_flat.1} parent=1 // pred_region
      _
    $region25: #{_forward_flat.1} parent=1 // pred_fallthru
      _
    // Predicated region
    $region26: #{_forward_flat.1} parent=1 // pred_check
      _
    $region27: #{_forward_flat.1} parent=1 // pred_check_branch
      %26 = sbr.rel (0) target = $region29
    $region28: #{_forward_flat.1} parent=1 // pred_region
      _
    $region29: #{_forward_flat.1} parent=1 // pred_fallthru
      _
    %v28 = vld [vmem:[%s0] sm:$0xff]
    %v29 = vld [vmem:[%s0 + $0x8] sm:$0xff]
    %v30 = vld [vmem:[%s0 + $0x10] sm:$0xff]
    %v31 = vld [vmem:[%s0 + $0x18] sm:$0xff]
    %v32 = vld [vmem:[%s0 + $0x20] sm:$0xff]
    %v33 = vld [vmem:[%s0 + $0x28] sm:$0xff]
    %v34 = vld [vmem:[%s0 + $0x30] sm:$0xff]
    %v35 = vld [vmem:[%s0 + $0x38] sm:$0xff]
    %v36 = vld [vmem:[%s0 + $0x40] sm:$0xff]
    %v37 = vld [vmem:[%s0 + $0x48] sm:$0xff]
    %v38 = vld [vmem:[%s0 + $0x50] sm:$0xff]
    %v39 = vld [vmem:[%s0 + $0x58] sm:$0xff]
    %v40 = vld [vmem:[%s0 + $0x60] sm:$0xff]
    %v41 = vld [vmem:[%s0 + $0x68] sm:$0xff]
    %v42 = vld [vmem:[%s0 + $0x70] sm:$0xff]
    %v43 = vld [vmem:[%s0 + $0x78] sm:$0xff]
    %v44 = vpack.c.bf16 %v29, %v28
    %v45 = vpack.c.bf16 %v31, %v30
    %v46 = vpack.c.bf16 %v33, %v32
    %v47 = vpack.c.bf16 %v35, %v34
    %v48 = vpack.c.bf16 %v37, %v36
    %v49 = vpack.c.bf16 %v39, %v38
    %v50 = vpack.c.bf16 %v41, %v40
    %v51 = vpack.c.bf16 %v43, %v42
    %v52 = vld [vmem:[%s1] sm:$0xf]
    %v53 = vld [vmem:[%s1 + $0x4] sm:$0xf]
    %v54 = vld [vmem:[%s1 + $0x8] sm:$0xf]
    %v55 = vld [vmem:[%s1 + $0xc] sm:$0xf]
    %v56 = vld [vmem:[%s2] sm:$0xff]
    %v57 = vld [vmem:[%s2 + $0x8] sm:$0xff]
    %v58 = vld [vmem:[%s2 + $0x10] sm:$0xff]
    %v59 = vld [vmem:[%s2 + $0x18] sm:$0xff]
    %61 = vset.pattern.permute.xlu0 0
    %62 = vperm.xlu0 %61, %v56
    %v63 = vpop.permute.xlu0 %62
    %66 = vset.pattern.permute.xlu0 0
    %67 = vperm.xlu0 %66, %v57
    %v68 = vpop.permute.xlu0 %67
    %71 = vset.pattern.permute.xlu0 0
    %72 = vperm.xlu0 %71, %v58
    %v73 = vpop.permute.xlu0 %72
    %76 = vset.pattern.permute.xlu0 0
    %77 = vperm.xlu0 %76, %v59
    %v78 = vpop.permute.xlu0 %77
    %v84 = vunpack.c.l.b16 %v52
    %v85 = vunpack.c.l.b16 %v53
    %v86 = vunpack.c.l.b16 %v54
    %v87 = vunpack.c.l.b16 %v55
    %v88 = vpack.c.b16 %v85, %v84
    %v89 = vpack.c.b16 %v87, %v86
    %vm90 = vcmask 130048
    %v92 = vsel %vm90, %v88, 0
    %v95 = vsel %vm90, %v89, 0
    %v98 = vsel %vm90, %v44, 0
    %v101 = vsel %vm90, %v45, 0
    %v104 = vsel %vm90, %v46, 0
    %v107 = vsel %vm90, %v47, 0
    %v110 = vsel %vm90, %v48, 0
    %v113 = vsel %vm90, %v49, 0
    %v116 = vsel %vm90, %v50, 0
    %v119 = vsel %vm90, %v51, 0
    %121 = vmatprep.subr.bf16.mxu0 0
    %122 = vmatpush1.bf16.xpose.msra.mxu0 %v119
    %123 = vmatprep.subr.bf16.mxu0 0
    %124 = vmatpush1.bf16.xpose.msra.mxu0 %v116
    %125 = vmatprep.subr.bf16.mxu0 0
    %126 = vmatpush1.bf16.xpose.msra.mxu0 %v113
    %127 = vmatprep.subr.bf16.mxu0 0
    %128 = vmatpush1.bf16.xpose.msra.mxu0 %v110
    %129 = vmatprep.subr.bf16.mxu0 0
    %130 = vmatpush1.bf16.xpose.msra.mxu0 %v107
    %131 = vmatprep.subr.bf16.mxu0 0
    %132 = vmatpush1.bf16.xpose.msra.mxu0 %v104
    %133 = vmatprep.subr.bf16.mxu0 0
    %134 = vmatpush1.bf16.xpose.msra.mxu0 %v101
    %135 = vmatprep.subr.bf16.mxu0 0
    %136 = vmatpush1.bf16.xpose.msra.mxu0 %v98
    %137 = vmatprep.subr.bf16.mxu0 0
    %138 = vmatpush2.bf16.xpose.msra.mxu0 0
    %139 = vmatprep.subr.bf16.mxu0 0
    %140 = vmatpush2.bf16.xpose.msra.mxu0 0
    %141 = vmatprep.subr.bf16.mxu0 0
    %142 = vmatpush2.bf16.xpose.msra.mxu0 0
    %143 = vmatprep.subr.bf16.mxu0 0
    %144 = vmatpush2.bf16.xpose.msra.mxu0 0
    %145 = vmatprep.subr.bf16.mxu0 0
    %146 = vmatpush2.bf16.xpose.msra.mxu0 0
    %147 = vmatprep.subr.bf16.mxu0 0
    %148 = vmatpush2.bf16.xpose.msra.mxu0 0
    %149 = vmatprep.subr.bf16.mxu0 0
    %150 = vmatpush2.bf16.xpose.msra.mxu0 0
    %151 = vmatprep.subr.bf16.mxu0 0
    %152 = vmatpush2.bf16.xpose.msra.mxu0 0
    %153 = vmatprep.mubr.bf16.mxu0 0
    %154 = vmatmul.mubr.bf16.gmra.mxu0 %v92
    %v155 = vpop.f32.mrf.mxu0
    %v156 = vadd.f32 %v63, %v155
    %v157 = vpop.f32.mrf.mxu0
    %v158 = vpop.f32.mrf.mxu0
    %v159 = vadd.f32 %v68, %v158
    %v160 = vpop.f32.mrf.mxu0
    %161 = vmatprep.mubr.bf16.mxu0 0
    %162 = vmatmul.mubr.bf16.gmra.mxu0 %v95
    %v163 = vpop.f32.mrf.mxu0
    %v164 = vadd.f32 %v73, %v163
    %v165 = vpop.f32.mrf.mxu0
    %v166 = vpop.f32.mrf.mxu0
    %v167 = vadd.f32 %v78, %v166
    %v168 = vpop.f32.mrf.mxu0
    %169 = vdwg.mxu0
    %v170 = vmax.f32 %v156, 0.0
    %v171 = vmax.f32 %v159, 0.0
    %v172 = vmax.f32 %v164, 0.0
    %v173 = vmax.f32 %v167, 0.0
    %v174 = vld [vmem:[%s3] sm:$0xf]
    %v175 = vld [vmem:[%s3 + $0x4] sm:$0xf]
    %v176 = vld [vmem:[%s3 + $0x8] sm:$0xf]
    %v177 = vld [vmem:[%s3 + $0xc] sm:$0xf]
    %v178 = vpack.c.bf16 %v171, %v170
    %v179 = vpack.c.bf16 %v173, %v172
    %v180 = vld [vmem:[%s4] sm:$0xff]
    %v181 = vld [vmem:[%s4 + $0x8] sm:$0xff]
    %v182 = vld [vmem:[%s4 + $0x10] sm:$0xff]
    %v183 = vld [vmem:[%s4 + $0x18] sm:$0xff]
    %185 = vset.pattern.permute.xlu0 0
    %186 = vperm.xlu0 %185, %v180
    %v187 = vpop.permute.xlu0 %186
    %190 = vset.pattern.permute.xlu0 0
    %191 = vperm.xlu0 %190, %v181
    %v192 = vpop.permute.xlu0 %191
    %195 = vset.pattern.permute.xlu0 0
    %196 = vperm.xlu0 %195, %v182
    %v197 = vpop.permute.xlu0 %196
    %200 = vset.pattern.permute.xlu0 0
    %201 = vperm.xlu0 %200, %v183
    %v202 = vpop.permute.xlu0 %201
    %v208 = vunpack.c.l.b16 %v174
    %v209 = vunpack.c.l.b16 %v175
    %v210 = vunpack.c.l.b16 %v176
    %v211 = vunpack.c.l.b16 %v177
    %v212 = vpack.c.b16 %v209, %v208
    %v213 = vpack.c.b16 %v211, %v210
    %vm214 = vcmask 261120
    %v216 = vsel %vm214, %v212, 0
    %v219 = vsel %vm214, %v213, 0
    %221 = vmatprep.subr.bf16.mxu0 0
    %222 = vmatpush1.bf16.msra.mxu0 0
    %223 = vmatprep.subr.bf16.mxu0 0
    %224 = vmatpush1.bf16.msra.mxu0 0
    %225 = vmatprep.subr.bf16.mxu0 0
    %226 = vmatpush1.bf16.msra.mxu0 0
    %227 = vmatprep.subr.bf16.mxu0 0
    %228 = vmatpush1.bf16.msra.mxu0 0
    %229 = vmatprep.subr.bf16.mxu0 0
    %230 = vmatpush1.bf16.msra.mxu0 0
    %231 = vmatprep.subr.bf16.mxu0 0
    %232 = vmatpush1.bf16.msra.mxu0 0
    %233 = vmatprep.subr.bf16.mxu0 0
    %234 = vmatpush1.bf16.msra.mxu0 %v179
    %235 = vmatprep.subr.bf16.mxu0 0
    %236 = vmatpush1.bf16.msra.mxu0 %v178
    %237 = vmatprep.subr.bf16.mxu0 0
    %238 = vmatpush2.bf16.msra.mxu0 0
    %239 = vmatprep.subr.bf16.mxu0 0
    %240 = vmatpush2.bf16.msra.mxu0 0
    %241 = vmatprep.subr.bf16.mxu0 0
    %242 = vmatpush2.bf16.msra.mxu0 0
    %243 = vmatprep.subr.bf16.mxu0 0
    %244 = vmatpush2.bf16.msra.mxu0 0
    %245 = vmatprep.subr.bf16.mxu0 0
    %246 = vmatpush2.bf16.msra.mxu0 0
    %247 = vmatprep.subr.bf16.mxu0 0
    %248 = vmatpush2.bf16.msra.mxu0 0
    %249 = vmatprep.subr.bf16.mxu0 0
    %250 = vmatpush2.bf16.msra.mxu0 0
    %251 = vmatprep.subr.bf16.mxu0 0
    %252 = vmatpush2.bf16.msra.mxu0 0
    %253 = vmatprep.mubr.bf16.mxu0 0
    %254 = vmatmul.mubr.bf16.gmra.mxu0 %v216
    %v255 = vpop.f32.mrf.mxu0
    %v256 = vadd.f32 %v187, %v255
    %v257 = vpop.f32.mrf.mxu0
    %v258 = vpop.f32.mrf.mxu0
    %v259 = vadd.f32 %v192, %v258
    %v260 = vpop.f32.mrf.mxu0
    %261 = vmatprep.mubr.bf16.mxu0 0
    %262 = vmatmul.mubr.bf16.gmra.mxu0 %v219
    %v263 = vpop.f32.mrf.mxu0
    %v264 = vadd.f32 %v197, %v263
    %v265 = vpop.f32.mrf.mxu0
    %v266 = vpop.f32.mrf.mxu0
    %v267 = vadd.f32 %v202, %v266
    %v268 = vpop.f32.mrf.mxu0
    %269 = vdwg.mxu0
    %v270 = vmax.f32 %v256, 0.0
    %v271 = vmax.f32 %v259, 0.0
    %v272 = vmax.f32 %v264, 0.0
    %v273 = vmax.f32 %v267, 0.0
    %v274 = vld [vmem:[%s5] sm:$0x3]
    %v275 = vpack.c.bf16 %v271, %v270
    %v276 = vpack.c.bf16 %v273, %v272
    %v277 = vld [vmem:[%s6] sm:$0xf]
    %279 = vset.pattern.permute.xlu0 0
    %280 = vperm.xlu0 %279, %v277
    %v281 = vpop.permute.xlu0 %280
    %v284 = vsel %vm214, %v274, 0
    %286 = vmatprep.subr.bf16.mxu0 0
    %287 = vmatpush1.bf16.msra.mxu0 0
    %288 = vmatprep.subr.bf16.mxu0 0
    %289 = vmatpush1.bf16.msra.mxu0 0
    %290 = vmatprep.subr.bf16.mxu0 0
    %291 = vmatpush1.bf16.msra.mxu0 0
    %292 = vmatprep.subr.bf16.mxu0 0
    %293 = vmatpush1.bf16.msra.mxu0 0
    %294 = vmatprep.subr.bf16.mxu0 0
    %295 = vmatpush1.bf16.msra.mxu0 0
    %296 = vmatprep.subr.bf16.mxu0 0
    %297 = vmatpush1.bf16.msra.mxu0 0
    %298 = vmatprep.subr.bf16.mxu0 0
    %299 = vmatpush1.bf16.msra.mxu0 %v276
    %300 = vmatprep.subr.bf16.mxu0 0
    %301 = vmatpush1.bf16.msra.mxu0 %v275
    %302 = vmatprep.subr.bf16.mxu0 0
    %303 = vmatpush2.bf16.msra.mxu0 0
    %304 = vmatprep.subr.bf16.mxu0 0
    %305 = vmatpush2.bf16.msra.mxu0 0
    %306 = vmatprep.subr.bf16.mxu0 0
    %307 = vmatpush2.bf16.msra.mxu0 0
    %308 = vmatprep.subr.bf16.mxu0 0
    %309 = vmatpush2.bf16.msra.mxu0 0
    %310 = vmatprep.subr.bf16.mxu0 0
    %311 = vmatpush2.bf16.msra.mxu0 0
    %312 = vmatprep.subr.bf16.mxu0 0
    %313 = vmatpush2.bf16.msra.mxu0 0
    %314 = vmatprep.subr.bf16.mxu0 0
    %315 = vmatpush2.bf16.msra.mxu0 0
    %316 = vmatprep.subr.bf16.mxu0 0
    %317 = vmatpush2.bf16.msra.mxu0 0
    %318 = vmatprep.mubr.bf16.mxu0 0
    %319 = vmatmul.mubr.bf16.gmra.mxu0 %v284
    %v320 = vpop.f32.mrf.mxu0
    %v321 = vadd.f32 %v281, %v320
    %v322 = vpop.f32.mrf.mxu0
    %v323 = vpop.f32.mrf.mxu0
    %v324 = vpop.f32.mrf.mxu0
    %325 = vdwg.mxu0
    %326 = vst [vmem:[#allocation2] sm:$0xf] %v321
    // Predicated region
    $region30: #{_forward_flat.1} parent=1 // pred_check
      _
    $region31: #{_forward_flat.1} parent=1 // pred_check_branch
      %328 = sbr.rel (0) target = $region33
    $region32: #{_forward_flat.1} parent=1 // pred_region
      %s330 = ssub.s32 64, 64
      %331 = vsyncadd [#allocation3], %s330
      %s333 = sshll.u32 [#allocation2], 4
      %s334 = int_to_ptr.vmem [resolvable:$true] %s333
      %336 = dma.vmem_to_hbm [thread:$0]  %s334, 64, %s7, [#allocation3]
    $region33: #{_forward_flat.1} parent=1 // pred_fallthru
      _
    // Predicated region
    $region34: #{_forward_flat.1} parent=1 // pred_check
      _
    $region35: #{_forward_flat.1} parent=1 // pred_check_branch
      %338 = sbr.rel (0) target = $region37
    $region36: #{_forward_flat.1} parent=1 // pred_region
      %339 = dma.done [#allocation3], 64
    $region37: #{_forward_flat.1} parent=1 // pred_fallthru
      _
    %340 = vsyncpa [#allocation3], 1

</llo_original>
